<compile_context>
chip_gen: v7x
topology: tpu7x:2x2x1
jax: 0.10.0
libtpu: 0.0.40
codegen_flags: <defaults>
</compile_context>

<pallas_src>
import functools

import jax
import jax.numpy as jnp
from jax.experimental import pallas as pl
from jax.experimental.pallas import tpu as pltpu

NEG_SLOPE = 0.1  # LeakyReLU(0.1)


def _leaky(v):
    return jnp.where(v >= 0, v, NEG_SLOPE * v)


def _st_gcn2d_kernel(x_ref, abd_ref, wg_ref, bg_ref, wt_ref, bt_ref, o_ref, *,
                     s_kernel_size, out_channels, t_kernel_size, n_vertices):
    """One batch element per grid step; everything stays lane-dense.

    x_ref  : (1, C_in, T*V)        activations, lanes = t*V + v
    abd_ref: (1, K, T*V, T*V)      block-diagonal adjacency (block t = A[k])
    o_ref  : (1, C_out, T_out*V)   output slab, lanes = to*V + w
    """
    K = s_kernel_size
    Cout = out_channels
    kt = t_kernel_size
    V = n_vertices
    _, C_in, TV = x_ref.shape
    T = TV // V
    T_out = T - kt + 1
    TOV = T_out * V

    xf = x_ref[0]               # (C_in, T*V)
    abd = abd_ref[0]            # (K, T*V, T*V)
    wg = wg_ref[...]            # (K*Cout, C_in)   gcn 1x1 conv weight
    bg = bg_ref[...]            # (K*Cout, 1)
    wt = wt_ref[...]            # (kt, Cout, Cout) tcn conv weight (tap-major)
    bt = bt_ref[...]            # (Cout, 1)

    # --- GraphConvNet2D stage 1: 1x1 conv over channels, all T timesteps in
    # a single lane-dense matmul (RHS is 128 lanes wide).
    y = jnp.dot(wg, xf, preferred_element_type=jnp.float32) + bg   # (K*Cout, T*V)

    # --- GraphConvNet2D stage 2: einsum('nkctv,nkvw->nctw').  With the
    # block-diagonal adjacency, each spatial tap k is ONE (Cout, T*V) @
    # (T*V, T*V) matmul (contraction depth 128, full lane occupancy).
    z = jnp.dot(y[0:Cout, :], abd[0], preferred_element_type=jnp.float32)
    for k in range(1, K):
        z = z + jnp.dot(y[k * Cout:(k + 1) * Cout, :], abd[k],
                        preferred_element_type=jnp.float32)

    # --- TCN stage 1: LeakyReLU(0.1) ---
    z = _leaky(z)                                                  # (Cout, T*V)

    # --- TCN stage 2: temporal conv (kt,1), stride 1, valid padding.
    # Each tap dt is a static contiguous lane slice of z -> kt matmuls of
    # (Cout, Cout) @ (Cout, T_out*V); accumulator initialized by tap 0 + bias.
    o = jnp.dot(wt[0], z[:, 0:TOV], preferred_element_type=jnp.float32) + bt
    for dt in range(1, kt):
        o = o + jnp.dot(wt[dt], z[:, dt * V:dt * V + TOV],
                        preferred_element_type=jnp.float32)

    # residual=False -> res == 0 ; final LeakyReLU(0.1); single slab store.
    o_ref[0] = _leaky(o).astype(o_ref.dtype)


def st_gcn2d_forward(x, A, params, *, s_kernel_size, out_channels,
                     t_kernel_size):
    N, C_in, T, V = x.shape
    K, Cout, kt = s_kernel_size, out_channels, t_kernel_size
    T_out = T - kt + 1
    assert A.shape == (N, K, V, V)

    wg = params["gcn_w"]                          # (K*Cout, C_in)
    bg = params["gcn_b"].reshape(K * Cout, 1)
    wt = params["tcn_w"]                          # (kt, Cout, Cout)
    bt = params["tcn_b"].reshape(Cout, 1)

    # Wrapper-side layout plumbing (no in-kernel relayouts):
    #  - fold the time axis into lanes for the activations,
    #  - build the block-diagonal adjacency so the per-t graph contraction
    #    becomes one lane-dense matmul per spatial tap k.
    xf = x.reshape(N, C_in, T * V)
    abd = jnp.einsum('tu,nkvw->nktvuw', jnp.eye(T, dtype=A.dtype), A)
    abd = abd.reshape(N, K, T * V, T * V)

    kernel = functools.partial(_st_gcn2d_kernel, s_kernel_size=K,
                               out_channels=Cout, t_kernel_size=kt,
                               n_vertices=V)

    out = pl.pallas_call(
        kernel,
        out_shape=jax.ShapeDtypeStruct((N, Cout, T_out * V), x.dtype),
        grid_spec=pltpu.PrefetchScalarGridSpec(
            num_scalar_prefetch=0,
            # One batch element per grid step: sharded across the two
            # TensorCores on v7x; a short 2-step loop on v5e/v6e.
            grid=(N,),
            in_specs=[
                pl.BlockSpec((1, C_in, T * V), lambda n: (n, 0, 0)),
                pl.BlockSpec((1, K, T * V, T * V), lambda n: (n, 0, 0, 0)),
                pl.BlockSpec((K * Cout, C_in), lambda n: (0, 0)),
                pl.BlockSpec((K * Cout, 1), lambda n: (0, 0)),
                pl.BlockSpec((kt, Cout, Cout), lambda n: (0, 0, 0)),
                pl.BlockSpec((Cout, 1), lambda n: (0, 0)),
            ],
            out_specs=pl.BlockSpec((1, Cout, T_out * V),
                                   lambda n: (n, 0, 0)),
        ),
        compiler_params=pltpu.CompilerParams(
            dimension_semantics=("parallel",)),
    )(xf, abd, wg, bg, wt, bt)

    return out.reshape(N, Cout, T_out, V), A


def st_gcn2d_reference(x, A, params, *, s_kernel_size, out_channels,
                       t_kernel_size):
    """Pure-JAX reference mirroring the PyTorch forward."""
    N, C_in, T, V = x.shape
    K, Cout, kt = s_kernel_size, out_channels, t_kernel_size
    wg, bg = params["gcn_w"], params["gcn_b"]
    wt, bt = params["tcn_w"], params["tcn_b"]

    y = jnp.einsum('oc,nctv->notv', wg, x) + bg[None, :, None, None]
    y = y.reshape(N, K, Cout, T, V)
    z = jnp.einsum('nkctv,nkvw->nctw', y, A)
    z = jnp.where(z >= 0, z, NEG_SLOPE * z)

    T_out = T - kt + 1
    o = jnp.zeros((N, Cout, T_out, V), x.dtype) + bt[None, :, None, None]
    for dt in range(kt):
        o = o + jnp.einsum('oc,nctv->notv', wt[dt], z[:, :, dt:dt + T_out, :])
    o = jnp.where(o >= 0, o, NEG_SLOPE * o)
    return o, A


if __name__ == "__main__":
    # Module config: ST_GCN2D(in_channels=4, out_channels=32,
    #     kernel_size=(3, 2), stride=1, residual=False, apply_gcn=True)
    N, C_in, Cout, T, V = 2, 4, 32, 8, 16
    kt, K = 3, 2

    key = jax.random.PRNGKey(0)
    kx, ka, k1, k2, k3, k4 = jax.random.split(key, 6)
    x = jax.random.normal(kx, (N, C_in, T, V), jnp.float32)
    A = jax.random.normal(ka, (N, K, V, V), jnp.float32) * 0.25

    # Deterministic synthetic parameters (shapes from the module __init__):
    params = {
        # gcn.conv = nn.Conv2d(C_in, K*Cout, (1,1)) -> weight (K*Cout, C_in, 1, 1)
        "gcn_w": jax.random.normal(k1, (K * Cout, C_in), jnp.float32) * 0.2,
        "gcn_b": jax.random.normal(k2, (K * Cout,), jnp.float32) * 0.05,
        # tcn[1] = nn.Conv2d(Cout, Cout, (kt,1)) -> weight (Cout, Cout, kt, 1),
        # stored here tap-major as (kt, Cout, Cout) for the kernel.
        "tcn_w": jax.random.normal(k3, (kt, Cout, Cout), jnp.float32) * 0.1,
        "tcn_b": jax.random.normal(k4, (Cout,), jnp.float32) * 0.05,
    }

    out, A_out = st_gcn2d_forward(x, A, params, s_kernel_size=K,
                                  out_channels=Cout, t_kernel_size=kt)
    out = jax.block_until_ready(out)

    ref, _ = st_gcn2d_reference(x, A, params, s_kernel_size=K,
                                out_channels=Cout, t_kernel_size=kt)
    assert out.shape == (N, Cout, T - kt + 1, V)
    max_err = float(jnp.max(jnp.abs(out - ref)))
    assert jnp.allclose(out, ref, rtol=1e-4, atol=1e-4), max_err
    print("KERNEL_OK")
</pallas_src>

<mosaic_0001>
module attributes {stable_mosaic.version = 11 : i64} {
  func.func @_st_gcn2d_kernel(%arg0: i32, %arg1: memref<1x4x128xf32, #tpu.memory_space<vmem>>, %arg2: memref<1x2x128x128xf32, #tpu.memory_space<vmem>>, %arg3: memref<64x4xf32, #tpu.memory_space<vmem>>, %arg4: memref<64x1xf32, #tpu.memory_space<vmem>>, %arg5: memref<3x32x32xf32, #tpu.memory_space<vmem>>, %arg6: memref<32x1xf32, #tpu.memory_space<vmem>>, %arg7: memref<1x32x96xf32, #tpu.memory_space<vmem>>) attributes {dimension_semantics = [#tpu.dimension_semantics<parallel>], iteration_bounds = array<i64: 2>, scalar_prefetch = 0 : i64, scratch_operands = 0 : i64, tpu.core_type = #tpu.core_type<tc>, window_params = [{transform_indices = @transform_0, window_bounds = array<i64: 1, 4, 128>}, {transform_indices = @transform_1, window_bounds = array<i64: 1, 2, 128, 128>}, {pipeline_mode = #tpu.pipeline_mode<synchronous>, transform_indices = @transform_2, window_bounds = array<i64: 64, 4>}, {pipeline_mode = #tpu.pipeline_mode<synchronous>, transform_indices = @transform_3, window_bounds = array<i64: 64, 1>}, {pipeline_mode = #tpu.pipeline_mode<synchronous>, transform_indices = @transform_4, window_bounds = array<i64: 3, 32, 32>}, {pipeline_mode = #tpu.pipeline_mode<synchronous>, transform_indices = @transform_5, window_bounds = array<i64: 32, 1>}, {transform_indices = @transform_6, window_bounds = array<i64: 1, 32, 96>}]} {
    %c0 = arith.constant 0 : index
    %c0_0 = arith.constant 0 : index
    %c0_1 = arith.constant 0 : index
    %0 = vector.load %arg1[%c0, %c0_0, %c0_1] : memref<1x4x128xf32, #tpu.memory_space<vmem>>, vector<1x4x128xf32>
    %1 = vector.shape_cast %0 : vector<1x4x128xf32> to vector<4x128xf32>
    %c0_2 = arith.constant 0 : index
    %c0_3 = arith.constant 0 : index
    %c0_4 = arith.constant 0 : index
    %c0_5 = arith.constant 0 : index
    %2 = vector.load %arg2[%c0_2, %c0_3, %c0_4, %c0_5] : memref<1x2x128x128xf32, #tpu.memory_space<vmem>>, vector<1x2x128x128xf32>
    %3 = vector.shape_cast %2 : vector<1x2x128x128xf32> to vector<2x128x128xf32>
    %c0_6 = arith.constant 0 : index
    %c0_7 = arith.constant 0 : index
    %4 = vector.load %arg3[%c0_6, %c0_7] : memref<64x4xf32, #tpu.memory_space<vmem>>, vector<64x4xf32>
    %c0_8 = arith.constant 0 : index
    %c0_9 = arith.constant 0 : index
    %5 = vector.load %arg4[%c0_8, %c0_9] : memref<64x1xf32, #tpu.memory_space<vmem>>, vector<64x1xf32>
    %c0_10 = arith.constant 0 : index
    %c0_11 = arith.constant 0 : index
    %c0_12 = arith.constant 0 : index
    %6 = vector.load %arg5[%c0_10, %c0_11, %c0_12] : memref<3x32x32xf32, #tpu.memory_space<vmem>>, vector<3x32x32xf32>
    %c0_13 = arith.constant 0 : index
    %c0_14 = arith.constant 0 : index
    %7 = vector.load %arg6[%c0_13, %c0_14] : memref<32x1xf32, #tpu.memory_space<vmem>>, vector<32x1xf32>
    %cst = arith.constant dense<0.000000e+00> : vector<64x128xf32>
    %8 = tpu.matmul %4, %1, %cst {dimension_numbers = #tpu.dot_dimension_numbers<[1], [0], [0], [1], [0, 0, 1, 1], [], []>} : vector<64x4xf32>, vector<4x128xf32>, vector<64x128xf32> -> vector<64x128xf32>
    %9 = vector.broadcast %5 : vector<64x1xf32> to vector<64x128xf32>
    %10 = arith.addf %8, %9 : vector<64x128xf32>
    %11 = vector.extract_strided_slice %10 {offsets = [0, 0], sizes = [32, 128], strides = [1, 1]} : vector<64x128xf32> to vector<32x128xf32>
    %12 = vector.extract_strided_slice %3 {offsets = [0, 0, 0], sizes = [1, 128, 128], strides = [1, 1, 1]} : vector<2x128x128xf32> to vector<1x128x128xf32>
    %13 = vector.shape_cast %12 : vector<1x128x128xf32> to vector<128x128xf32>
    %cst_15 = arith.constant dense<0.000000e+00> : vector<32x128xf32>
    %14 = tpu.matmul %11, %13, %cst_15 {dimension_numbers = #tpu.dot_dimension_numbers<[1], [0], [0], [1], [0, 0, 1, 1], [], []>} : vector<32x128xf32>, vector<128x128xf32>, vector<32x128xf32> -> vector<32x128xf32>
    %15 = vector.extract_strided_slice %10 {offsets = [32, 0], sizes = [32, 128], strides = [1, 1]} : vector<64x128xf32> to vector<32x128xf32>
    %16 = vector.extract_strided_slice %3 {offsets = [1, 0, 0], sizes = [1, 128, 128], strides = [1, 1, 1]} : vector<2x128x128xf32> to vector<1x128x128xf32>
    %17 = vector.shape_cast %16 : vector<1x128x128xf32> to vector<128x128xf32>
    %cst_16 = arith.constant dense<0.000000e+00> : vector<32x128xf32>
    %18 = tpu.matmul %15, %17, %cst_16 {dimension_numbers = #tpu.dot_dimension_numbers<[1], [0], [0], [1], [0, 0, 1, 1], [], []>} : vector<32x128xf32>, vector<128x128xf32>, vector<32x128xf32> -> vector<32x128xf32>
    %19 = arith.addf %14, %18 : vector<32x128xf32>
    %cst_17 = arith.constant 0.000000e+00 : f32
    %20 = vector.broadcast %cst_17 : f32 to vector<32x128xf32>
    %21 = arith.cmpf oge, %19, %20 : vector<32x128xf32>
    %cst_18 = arith.constant 1.000000e-01 : f32
    %22 = vector.broadcast %cst_18 : f32 to vector<32x128xf32>
    %23 = arith.mulf %22, %19 : vector<32x128xf32>
    %24 = arith.select %21, %19, %23 : vector<32x128xi1>, vector<32x128xf32>
    %25 = vector.extract_strided_slice %6 {offsets = [0, 0, 0], sizes = [1, 32, 32], strides = [1, 1, 1]} : vector<3x32x32xf32> to vector<1x32x32xf32>
    %26 = vector.shape_cast %25 : vector<1x32x32xf32> to vector<32x32xf32>
    %27 = vector.extract_strided_slice %24 {offsets = [0, 0], sizes = [32, 96], strides = [1, 1]} : vector<32x128xf32> to vector<32x96xf32>
    %cst_19 = arith.constant dense<0.000000e+00> : vector<32x96xf32>
    %28 = tpu.matmul %26, %27, %cst_19 {dimension_numbers = #tpu.dot_dimension_numbers<[1], [0], [0], [1], [0, 0, 1, 1], [], []>} : vector<32x32xf32>, vector<32x96xf32>, vector<32x96xf32> -> vector<32x96xf32>
    %29 = vector.broadcast %7 : vector<32x1xf32> to vector<32x96xf32>
    %30 = arith.addf %28, %29 : vector<32x96xf32>
    %31 = vector.extract_strided_slice %6 {offsets = [1, 0, 0], sizes = [1, 32, 32], strides = [1, 1, 1]} : vector<3x32x32xf32> to vector<1x32x32xf32>
    %32 = vector.shape_cast %31 : vector<1x32x32xf32> to vector<32x32xf32>
    %33 = vector.extract_strided_slice %24 {offsets = [0, 16], sizes = [32, 96], strides = [1, 1]} : vector<32x128xf32> to vector<32x96xf32>
    %cst_20 = arith.constant dense<0.000000e+00> : vector<32x96xf32>
    %34 = tpu.matmul %32, %33, %cst_20 {dimension_numbers = #tpu.dot_dimension_numbers<[1], [0], [0], [1], [0, 0, 1, 1], [], []>} : vector<32x32xf32>, vector<32x96xf32>, vector<32x96xf32> -> vector<32x96xf32>
    %35 = arith.addf %30, %34 : vector<32x96xf32>
    %36 = vector.extract_strided_slice %6 {offsets = [2, 0, 0], sizes = [1, 32, 32], strides = [1, 1, 1]} : vector<3x32x32xf32> to vector<1x32x32xf32>
    %37 = vector.shape_cast %36 : vector<1x32x32xf32> to vector<32x32xf32>
    %38 = vector.extract_strided_slice %24 {offsets = [0, 32], sizes = [32, 96], strides = [1, 1]} : vector<32x128xf32> to vector<32x96xf32>
    %cst_21 = arith.constant dense<0.000000e+00> : vector<32x96xf32>
    %39 = tpu.matmul %37, %38, %cst_21 {dimension_numbers = #tpu.dot_dimension_numbers<[1], [0], [0], [1], [0, 0, 1, 1], [], []>} : vector<32x32xf32>, vector<32x96xf32>, vector<32x96xf32> -> vector<32x96xf32>
    %40 = arith.addf %35, %39 : vector<32x96xf32>
    %cst_22 = arith.constant 0.000000e+00 : f32
    %41 = vector.broadcast %cst_22 : f32 to vector<32x96xf32>
    %42 = arith.cmpf oge, %40, %41 : vector<32x96xf32>
    %cst_23 = arith.constant 1.000000e-01 : f32
    %43 = vector.broadcast %cst_23 : f32 to vector<32x96xf32>
    %44 = arith.mulf %43, %40 : vector<32x96xf32>
    %45 = arith.select %42, %40, %44 : vector<32x96xi1>, vector<32x96xf32>
    %c0_24 = arith.constant 0 : index
    %c0_25 = arith.constant 0 : index
    %c0_26 = arith.constant 0 : index
    %46 = vector.load %arg7[%c0_24, %c0_25, %c0_26] : memref<1x32x96xf32, #tpu.memory_space<vmem>>, vector<1x32x96xf32>
    %47 = vector.shape_cast %46 : vector<1x32x96xf32> to vector<32x96xf32>
    %48 = vector.shape_cast %45 : vector<32x96xf32> to vector<1x32x96xf32>
    tpu.vector_store %arg7[%c0_24, %c0_25, %c0_26], %48 {strides = array<i32>} : memref<1x32x96xf32, #tpu.memory_space<vmem>>, vector<1x32x96xf32>,
    return
  }
  func.func @transform_0(%arg0: i32) -> (i32, i32, i32) {
    %c0_i32 = arith.constant 0 : i32
    %c0_i32_0 = arith.constant 0 : i32
    %c0_i32_1 = arith.constant 0 : i32
    return %arg0, %c0_i32, %c0_i32_0 : i32, i32, i32
  }
  func.func @transform_1(%arg0: i32) -> (i32, i32, i32, i32) {
    %c0_i32 = arith.constant 0 : i32
    %c0_i32_0 = arith.constant 0 : i32
    %c0_i32_1 = arith.constant 0 : i32
    %c0_i32_2 = arith.constant 0 : i32
    return %arg0, %c0_i32, %c0_i32_0, %c0_i32_1 : i32, i32, i32, i32
  }
  func.func @transform_2(%arg0: i32) -> (i32, i32) {
    %c0_i32 = arith.constant 0 : i32
    %c0_i32_0 = arith.constant 0 : i32
    %c0_i32_1 = arith.constant 0 : i32
    return %c0_i32, %c0_i32_0 : i32, i32
  }
  func.func @transform_3(%arg0: i32) -> (i32, i32) {
    %c0_i32 = arith.constant 0 : i32
    %c0_i32_0 = arith.constant 0 : i32
    %c0_i32_1 = arith.constant 0 : i32
    return %c0_i32, %c0_i32_0 : i32, i32
  }
  func.func @transform_4(%arg0: i32) -> (i32, i32, i32) {
    %c0_i32 = arith.constant 0 : i32
    %c0_i32_0 = arith.constant 0 : i32
    %c0_i32_1 = arith.constant 0 : i32
    %c0_i32_2 = arith.constant 0 : i32
    return %c0_i32, %c0_i32_0, %c0_i32_1 : i32, i32, i32
  }
  func.func @transform_5(%arg0: i32) -> (i32, i32) {
    %c0_i32 = arith.constant 0 : i32
    %c0_i32_0 = arith.constant 0 : i32
    %c0_i32_1 = arith.constant 0 : i32
    return %c0_i32, %c0_i32_0 : i32, i32
  }
  func.func @transform_6(%arg0: i32) -> (i32, i32, i32) {
    %c0_i32 = arith.constant 0 : i32
    %c0_i32_0 = arith.constant 0 : i32
    %c0_i32_1 = arith.constant 0 : i32
    return %arg0, %c0_i32, %c0_i32_0 : i32, i32, i32
  }
}

</mosaic_0001>

<llo_original>
// kernel: tpu_custom_call.1
$region0: #{tpu_custom_call.1}
  #allocation0 [shape = 'u32[]', space=smem, size = 0x4, offset = 0x4, fixed_abs, tag = 'smem constant byte address 0x4 - core index']
  #allocation1 [shape = 'u32[144,128]{1,0:T(1,128)}', space=vmem, size = 0x12000, scoped, tag = 'internal scratch']
  %s0 = inlined_call_operand.vmem [shape: f32[2,4,128], index: 0, kind: input, shape index: {}]
  %s1 = inlined_call_operand.hbm [shape: f32[2,2,128,128], index: 1, kind: input, shape index: {}]
  %s2 = inlined_call_operand.vmem [shape: f32[64,4], index: 2, kind: input, shape index: {}]
  %s3 = inlined_call_operand.vmem [shape: f32[64,1], index: 3, kind: input, shape index: {}]
  %s4 = inlined_call_operand.vmem [shape: f32[3,32,32], index: 4, kind: input, shape index: {}]
  %s5 = inlined_call_operand.vmem [shape: f32[32,1], index: 5, kind: input, shape index: {}]
  %s6 = inlined_call_operand.hbm [shape: f32[2,32,96], index: 6, kind: output, shape index: {}]
  %s7 = sld [smem:[#allocation0]]
  $region61: #{tpu_custom_call.1} parent=0
    _
  %s9 = ssub.s32 1, %s7
  %s10 = scalar_select 0, %s9, %s7
  $region1: #{tpu_custom_call.1} parent=0
    #allocation2 [shape = 'u8[262144]{0}', space=vmem, size = 0x40000, scoped, tag = 'input window, operand 1']
    #allocation3 [shape = 's32[2]{0}', space=sflag, size = 0x8, scoped, tag = 'scoped memory for tpu_custom_call.1']
    #allocation4 [shape = 's32[2]{0}', space=sflag, size = 0x8, scoped, tag = 'scoped memory for tpu_custom_call.1']
    #allocation5 [shape = 'u8[32768]{0}', space=vmem, size = 0x8000, scoped, tag = 'output window, operand 0']
    %11 = vsyncpa [#allocation3], 0
    %s12 = scalar_lea.sflag [#allocation3], 1
    %13 = vsyncpa %s12, 0
    %14 = vsyncpa [#allocation4], 0
    %s15 = scalar_lea.sflag [#allocation4], 1
    %16 = vsyncpa %s15, 0
    loop: start=0, step=1, limit=4
    $region2: #{tpu_custom_call.1} parent=1 // loop_pre_header
      _
    $region3: #{tpu_custom_call.1} parent=1 // loop_header
      %s18 = sphi 0, %s22
      %p19 = scmp.ge.s32.totalorder %s18, 4
      %s28 = sphi 0, %s30
      %s31 = sphi 0, %s28
      %s32 = sphi 0, %s31
      %s48 = sphi 0, %s32
      %s54 = sphi 0, %s56
      %s57 = sphi 0, %s54
      %s58 = sphi 0, %s57
      %s74 = sphi 0, %s58
      %s78 = sphi 0, %s78
      %s80 = sphi 0, %s78
      %s81 = sphi 0, %s80
      %s95 = sphi 0, %s81
      %s99 = sphi 0, %s99
      %s101 = sphi 0, %s99
      %s102 = sphi 0, %s101
      %s116 = sphi 0, %s102
      %s120 = sphi 0, %s120
      %s122 = sphi 0, %s120
      %s123 = sphi 0, %s122
      %s137 = sphi 0, %s123
      %s141 = sphi 0, %s141
      %s143 = sphi 0, %s141
      %s144 = sphi 0, %s143
      %s158 = sphi 0, %s144
      %s164 = sphi 0, %s166
      %s167 = sphi 0, %s164
      %s168 = sphi 0, %s167
      %s184 = sphi 0, %s168
    $region4: #{tpu_custom_call.1} parent=1 // loop_header_branch
      %21 = sbr.rel (%p19) target = $region8
    $region5: #{tpu_custom_call.1} parent=1 // loop_body
      %s23 = ssub.s32 %s18, 1
      %s24 = ssub.s32 %s18, 2
      %s25 = sadd.s32 %s18, 1
      %s26 = ssub.s32 %s18, %s25
      %p27 = scmp.eq.s32.totalorder %s26, 0
      %s29 = sadd.s32 %s28, 1
      %s30 = scalar_select %p27, %s28, %s29
      %p33 = pneg %p27
      %p34 = scmp.eq.s32.totalorder %s18, 1
      %p35 = por %p33, %p34
      %p36 = scmp.ne.s32.totalorder %s28, %s31
      %p37 = scmp.eq.s32.totalorder %s18, 0
      %p38 = por %p36, %p37
      %p39 = scmp.ne.s32.totalorder %s28, %s31
      %p40 = scmp.eq.s32.totalorder %s23, 1
      %p41 = por %p39, %p40
      %p42 = scmp.ne.s32.totalorder %s31, %s32
      %p43 = scmp.eq.s32.totalorder %s23, 0
      %p44 = por %p42, %p43
      %p45 = scmp.ne.s32.totalorder %s31, %s32
      %p46 = scmp.eq.s32.totalorder %s24, 1
      %p47 = por %p45, %p46
      %p49 = scmp.ne.s32.totalorder %s32, %s48
      %p50 = scmp.eq.s32.totalorder %s24, 0
      %p51 = por %p49, %p50
      %s52 = ssub.s32 %s18, %s25
      %p53 = scmp.eq.s32.totalorder %s52, 0
      %s55 = sadd.s32 %s54, 1
      %s56 = scalar_select %p53, %s54, %s55
      %p59 = pneg %p53
      %p60 = scmp.eq.s32.totalorder %s18, 1
      %p61 = por %p59, %p60
      %p62 = scmp.ne.s32.totalorder %s54, %s57
      %p63 = scmp.eq.s32.totalorder %s18, 0
      %p64 = por %p62, %p63
      %p65 = scmp.ne.s32.totalorder %s54, %s57
      %p66 = scmp.eq.s32.totalorder %s23, 1
      %p67 = por %p65, %p66
      %p68 = scmp.ne.s32.totalorder %s57, %s58
      %p69 = scmp.eq.s32.totalorder %s23, 0
      %p70 = por %p68, %p69
      %p71 = scmp.ne.s32.totalorder %s57, %s58
      %p72 = scmp.eq.s32.totalorder %s24, 1
      %p73 = por %p71, %p72
      %p75 = scmp.ne.s32.totalorder %s58, %s74
      %p76 = scmp.eq.s32.totalorder %s24, 0
      %p77 = por %p75, %p76
      %s79 = sadd.s32 %s78, 1
      %p82 = scmp.eq.s32.totalorder %s18, 1
      %p83 = scmp.ne.s32.totalorder %s78, %s80
      %p84 = scmp.eq.s32.totalorder %s18, 0
      %p85 = por %p83, %p84
      %p86 = scmp.ne.s32.totalorder %s78, %s80
      %p87 = scmp.eq.s32.totalorder %s23, 1
      %p88 = por %p86, %p87
      %p89 = scmp.ne.s32.totalorder %s80, %s81
      %p90 = scmp.eq.s32.totalorder %s23, 0
      %p91 = por %p89, %p90
      %p92 = scmp.ne.s32.totalorder %s80, %s81
      %p93 = scmp.eq.s32.totalorder %s24, 1
      %p94 = por %p92, %p93
      %p96 = scmp.ne.s32.totalorder %s81, %s95
      %p97 = scmp.eq.s32.totalorder %s24, 0
      %p98 = por %p96, %p97
      %s100 = sadd.s32 %s99, 1
      %p103 = scmp.eq.s32.totalorder %s18, 1
      %p104 = scmp.ne.s32.totalorder %s99, %s101
      %p105 = scmp.eq.s32.totalorder %s18, 0
      %p106 = por %p104, %p105
      %p107 = scmp.ne.s32.totalorder %s99, %s101
      %p108 = scmp.eq.s32.totalorder %s23, 1
      %p109 = por %p107, %p108
      %p110 = scmp.ne.s32.totalorder %s101, %s102
      %p111 = scmp.eq.s32.totalorder %s23, 0
      %p112 = por %p110, %p111
      %p113 = scmp.ne.s32.totalorder %s101, %s102
      %p114 = scmp.eq.s32.totalorder %s24, 1
      %p115 = por %p113, %p114
      %p117 = scmp.ne.s32.totalorder %s102, %s116
      %p118 = scmp.eq.s32.totalorder %s24, 0
      %p119 = por %p117, %p118
      %s121 = sadd.s32 %s120, 1
      %p124 = scmp.eq.s32.totalorder %s18, 1
      %p125 = scmp.ne.s32.totalorder %s120, %s122
      %p126 = scmp.eq.s32.totalorder %s18, 0
      %p127 = por %p125, %p126
      %p128 = scmp.ne.s32.totalorder %s120, %s122
      %p129 = scmp.eq.s32.totalorder %s23, 1
      %p130 = por %p128, %p129
      %p131 = scmp.ne.s32.totalorder %s122, %s123
      %p132 = scmp.eq.s32.totalorder %s23, 0
      %p133 = por %p131, %p132
      %p134 = scmp.ne.s32.totalorder %s122, %s123
      %p135 = scmp.eq.s32.totalorder %s24, 1
      %p136 = por %p134, %p135
      %p138 = scmp.ne.s32.totalorder %s123, %s137
      %p139 = scmp.eq.s32.totalorder %s24, 0
      %p140 = por %p138, %p139
      %s142 = sadd.s32 %s141, 1
      %p145 = scmp.eq.s32.totalorder %s18, 1
      %p146 = scmp.ne.s32.totalorder %s141, %s143
      %p147 = scmp.eq.s32.totalorder %s18, 0
      %p148 = por %p146, %p147
      %p149 = scmp.ne.s32.totalorder %s141, %s143
      %p150 = scmp.eq.s32.totalorder %s23, 1
      %p151 = por %p149, %p150
      %p152 = scmp.ne.s32.totalorder %s143, %s144
      %p153 = scmp.eq.s32.totalorder %s23, 0
      %p154 = por %p152, %p153
      %p155 = scmp.ne.s32.totalorder %s143, %s144
      %p156 = scmp.eq.s32.totalorder %s24, 1
      %p157 = por %p155, %p156
      %p159 = scmp.ne.s32.totalorder %s144, %s158
      %p160 = scmp.eq.s32.totalorder %s24, 0
      %p161 = por %p159, %p160
      %s162 = ssub.s32 %s18, %s25
      %p163 = scmp.eq.s32.totalorder %s162, 0
      %s165 = sadd.s32 %s164, 1
      %s166 = scalar_select %p163, %s164, %s165
      %p169 = pneg %p163
      %p170 = scmp.eq.s32.totalorder %s18, 1
      %p171 = por %p169, %p170
      %p172 = scmp.ne.s32.totalorder %s164, %s167
      %p173 = scmp.eq.s32.totalorder %s18, 0
      %p174 = por %p172, %p173
      %p175 = scmp.ne.s32.totalorder %s164, %s167
      %p176 = scmp.eq.s32.totalorder %s23, 1
      %p177 = por %p175, %p176
      %p178 = scmp.ne.s32.totalorder %s167, %s168
      %p179 = scmp.eq.s32.totalorder %s23, 0
      %p180 = por %p178, %p179
      %p181 = scmp.ne.s32.totalorder %s167, %s168
      %p182 = scmp.eq.s32.totalorder %s24, 1
      %p183 = por %p181, %p182
      %p185 = scmp.ne.s32.totalorder %s168, %s184
      %p186 = scmp.eq.s32.totalorder %s24, 0
      %p187 = por %p185, %p186
      %p188 = scmp.le.s32.totalorder 1, %s18
      %p189 = scmp.lt.s32.totalorder %s18, 3
      %p190 = pnand %p188, %p189
      %p191 = pneg %p190
      // Predicated region
      $region9: #{tpu_custom_call.1} parent=5 // pred_check
        _
      $region10: #{tpu_custom_call.1} parent=5 // pred_check_branch
        %193 = sbr.rel (%p190) target = $region12
      $region11: #{tpu_custom_call.1} parent=5 // pred_region
        %s194 = ssub.s32 %s18, 1
        // Predicated region
        $region13: #{tpu_custom_call.1} parent=11 // pred_check
          %p195 = pneg %p91
        $region14: #{tpu_custom_call.1} parent=11 // pred_check_branch
          %197 = sbr.rel (%p195) target = $region16
        $region15: #{tpu_custom_call.1} parent=11 // pred_region
          _
        $region16: #{tpu_custom_call.1} parent=11 // pred_fallthru
          _
        // Predicated region
        $region17: #{tpu_custom_call.1} parent=11 // pred_check
          %p198 = pneg %p112
        $region18: #{tpu_custom_call.1} parent=11 // pred_check_branch
          %200 = sbr.rel (%p198) target = $region20
        $region19: #{tpu_custom_call.1} parent=11 // pred_region
          _
        $region20: #{tpu_custom_call.1} parent=11 // pred_fallthru
          _
        // Predicated region
        $region21: #{tpu_custom_call.1} parent=11 // pred_check
          %p201 = pneg %p133
        $region22: #{tpu_custom_call.1} parent=11 // pred_check_branch
          %203 = sbr.rel (%p201) target = $region24
        $region23: #{tpu_custom_call.1} parent=11 // pred_region
          _
        $region24: #{tpu_custom_call.1} parent=11 // pred_fallthru
          _
        // Predicated region
        $region25: #{tpu_custom_call.1} parent=11 // pred_check
          %p204 = pneg %p154
        $region26: #{tpu_custom_call.1} parent=11 // pred_check_branch
          %206 = sbr.rel (%p204) target = $region28
        $region27: #{tpu_custom_call.1} parent=11 // pred_region
          _
        $region28: #{tpu_custom_call.1} parent=11 // pred_fallthru
          _
      $region12: #{tpu_custom_call.1} parent=5 // pred_fallthru
        _
      %p207 = scmp.lt.s32.totalorder %s18, 2
      // Predicated region
      $region29: #{tpu_custom_call.1} parent=5 // pred_check
        %p208 = pneg %p207
      $region30: #{tpu_custom_call.1} parent=5 // pred_check_branch
        %210 = sbr.rel (%p208) target = $region32
      $region31: #{tpu_custom_call.1} parent=5 // pred_region
        // Predicated region
        $region33: #{tpu_custom_call.1} parent=31 // pred_check
          %p211 = pneg %p38
        $region34: #{tpu_custom_call.1} parent=31 // pred_check_branch
          %213 = sbr.rel (%p211) target = $region36
        $region35: #{tpu_custom_call.1} parent=31 // pred_region
          %p214 = scmp.lt.s32.totalorder %s18, 1
          %s215 = scalar_select %p214, %s18, 1
          %s216 = smul.addr %s215, 4
          %s217 = scalar_lea.vmem %s0, %s216
        $region36: #{tpu_custom_call.1} parent=31 // pred_fallthru
          _
        // Predicated region
        $region37: #{tpu_custom_call.1} parent=31 // pred_check
          %p218 = pneg %p64
        $region38: #{tpu_custom_call.1} parent=31 // pred_check_branch
          %220 = sbr.rel (%p218) target = $region40
        $region39: #{tpu_custom_call.1} parent=31 // pred_region
          %s221 = sand.u32 %s54, 1
          %s222 = scalar_lea.sflag [#allocation3], %s221
          %s223 = sand.u32 %s54, 1
          %s224 = smul.addr %s223, 256
          %s225 = scalar_lea.vmem [#allocation2], %s224
          %s227 = ssub.s32 4096, 4096
          %228 = vsyncadd %s222, %s227
          %s229 = smul.addr %s18, 32
          %s230 = smul.addr %s229, 128
          %s231 = scalar_lea.hbm %s1, %s230
          %s232 = sshll.u32 %s225, 4
          %s233 = int_to_ptr.vmem [resolvable:$true] %s232
          %238 = dma.hbm_to_vmem [thread:$0]  %s231, 4096, %s233, %s222, 128, 128, 8
        $region40: #{tpu_custom_call.1} parent=31 // pred_fallthru
          _
      $region32: #{tpu_custom_call.1} parent=5 // pred_fallthru
        _
      %p239 = scmp.le.s32.totalorder 1, %s18
      %p240 = scmp.lt.s32.totalorder %s18, 3
      %p241 = pnand %p239, %p240
      %p242 = pneg %p241
      // Predicated region
      $region41: #{tpu_custom_call.1} parent=5 // pred_check
        _
      $region42: #{tpu_custom_call.1} parent=5 // pred_check_branch
        %244 = sbr.rel (%p241) target = $region44
      $region43: #{tpu_custom_call.1} parent=5 // pred_region
        %s245 = ssub.s32 %s18, 1
        %s246 = sand.u32 %s57, 1
        %s247 = scalar_lea.sflag [#allocation3], %s246
        %s248 = sand.u32 %s57, 1
        %s249 = smul.addr %s248, 256
        %s250 = scalar_lea.vmem [#allocation2], %s249
        // Predicated region
        $region45: #{tpu_custom_call.1} parent=43 // pred_check
          %p251 = pneg %p70
        $region46: #{tpu_custom_call.1} parent=43 // pred_check_branch
          %253 = sbr.rel (%p251) target = $region48
        $region47: #{tpu_custom_call.1} parent=43 // pred_region
          %254 = dma.done %s247, 4096
        $region48: #{tpu_custom_call.1} parent=43 // pred_fallthru
          _
        %p255 = scmp.lt.s32.totalorder %s23, 1
        %s256 = scalar_select %p255, %s23, 1
        %s257 = smul.addr %s256, 4
        %s258 = scalar_lea.vmem %s0, %s257
        %p259 = pneg %p44
        %p260 = pneg %p41
        %s261 = sand.u32 %s57, 1
        %s262 = scalar_lea.sflag [#allocation3], %s261
        %s263 = sand.u32 %s57, 1
        %s264 = smul.addr %s263, 256
        %s265 = scalar_lea.vmem [#allocation2], %s264
        %p266 = pneg %p70
        %p267 = pneg %p67
        %p268 = pneg %p91
        %p269 = pneg %p88
        %p270 = pneg %p112
        %p271 = pneg %p109
        %p272 = pneg %p133
        %p273 = pneg %p130
        %p274 = pneg %p154
        %p275 = pneg %p151
        %p276 = pneg %p180
        %p277 = pneg %p177
        %s278 = sand.u32 %s167, 1
        %s279 = scalar_lea.sflag [#allocation4], %s278
        %s280 = sand.u32 %s167, 1
        %s281 = smul.addr %s280, 32
        %s282 = scalar_lea.vmem [#allocation5], %s281
        %p283 = scmp.lt.s32.totalorder %s23, 1
        %s284 = scalar_select %p283, %s23, 1
        %s285 = smul.addr %s284, 4
        %s286 = scalar_lea.vmem %s0, %s285
        %v287 = vld [vmem:[%s286] sm:$0xf]
        %v288 = vld [vmem:[%s250] sm:$0xff]
        %v289 = vld [vmem:[%s250 + $0x8] sm:$0xff]
        %v290 = vld [vmem:[%s250 + $0x10] sm:$0xff]
        %v291 = vld [vmem:[%s250 + $0x18] sm:$0xff]
        %v292 = vld [vmem:[%s250 + $0x20] sm:$0xff]
        %v293 = vld [vmem:[%s250 + $0x28] sm:$0xff]
        %v294 = vld [vmem:[%s250 + $0x30] sm:$0xff]
        %v295 = vld [vmem:[%s250 + $0x38] sm:$0xff]
        %v296 = vld [vmem:[%s250 + $0x40] sm:$0xff]
        %v297 = vld [vmem:[%s250 + $0x48] sm:$0xff]
        %v298 = vld [vmem:[%s250 + $0x50] sm:$0xff]
        %v299 = vld [vmem:[%s250 + $0x58] sm:$0xff]
        %v300 = vld [vmem:[%s250 + $0x60] sm:$0xff]
        %v301 = vld [vmem:[%s250 + $0x68] sm:$0xff]
        %v302 = vld [vmem:[%s250 + $0x70] sm:$0xff]
        %v303 = vld [vmem:[%s250 + $0x78] sm:$0xff]
        %v304 = vld [vmem:[%s250 + $0x80] sm:$0xff]
        %v305 = vld [vmem:[%s250 + $0x88] sm:$0xff]
        %v306 = vld [vmem:[%s250 + $0x90] sm:$0xff]
        %v307 = vld [vmem:[%s250 + $0x98] sm:$0xff]
        %v308 = vld [vmem:[%s250 + $0xa0] sm:$0xff]
        %v309 = vld [vmem:[%s250 + $0xa8] sm:$0xff]
        %v310 = vld [vmem:[%s250 + $0xb0] sm:$0xff]
        %v311 = vld [vmem:[%s250 + $0xb8] sm:$0xff]
        %v312 = vld [vmem:[%s250 + $0xc0] sm:$0xff]
        %v313 = vld [vmem:[%s250 + $0xc8] sm:$0xff]
        %v314 = vld [vmem:[%s250 + $0xd0] sm:$0xff]
        %v315 = vld [vmem:[%s250 + $0xd8] sm:$0xff]
        %v316 = vld [vmem:[%s250 + $0xe0] sm:$0xff]
        %v317 = vld [vmem:[%s250 + $0xe8] sm:$0xff]
        %v318 = vld [vmem:[%s250 + $0xf0] sm:$0xff]
        %v319 = vld [vmem:[%s250 + $0xf8] sm:$0xff]
        %v320 = vld [vmem:[%s2] sm:$0xff]
        %v321 = vld [vmem:[%s2 + $0x8] sm:$0xff]
        %v322 = vld [vmem:[%s2 + $0x10] sm:$0xff]
        %v323 = vld [vmem:[%s2 + $0x18] sm:$0xff]
        %v324 = vld [vmem:[%s2 + $0x20] sm:$0xff]
        %v325 = vld [vmem:[%s2 + $0x28] sm:$0xff]
        %v326 = vld [vmem:[%s2 + $0x30] sm:$0xff]
        %v327 = vld [vmem:[%s2 + $0x38] sm:$0xff]
        %v328 = vld [vmem:[%s3] sm:$0xff]
        %v329 = vld [vmem:[%s3 + $0x8] sm:$0xff]
        %v330 = vld [vmem:[%s3 + $0x10] sm:$0xff]
        %v331 = vld [vmem:[%s3 + $0x18] sm:$0xff]
        %v332 = vld [vmem:[%s3 + $0x20] sm:$0xff]
        %v333 = vld [vmem:[%s3 + $0x28] sm:$0xff]
        %v334 = vld [vmem:[%s3 + $0x30] sm:$0xff]
        %v335 = vld [vmem:[%s3 + $0x38] sm:$0xff]
        %v336 = vld [vmem:[%s4] sm:$0xff]
        %v337 = vld [vmem:[%s4 + $0x8] sm:$0xff]
        %v338 = vld [vmem:[%s4 + $0x10] sm:$0xff]
        %v339 = vld [vmem:[%s4 + $0x18] sm:$0xff]
        %v340 = vld [vmem:[%s4 + $0x20] sm:$0xff]
        %v341 = vld [vmem:[%s4 + $0x28] sm:$0xff]
        %v342 = vld [vmem:[%s4 + $0x30] sm:$0xff]
        %v343 = vld [vmem:[%s4 + $0x38] sm:$0xff]
        %v344 = vld [vmem:[%s4 + $0x40] sm:$0xff]
        %v345 = vld [vmem:[%s4 + $0x48] sm:$0xff]
        %v346 = vld [vmem:[%s4 + $0x50] sm:$0xff]
        %v347 = vld [vmem:[%s4 + $0x58] sm:$0xff]
        %v348 = vld [vmem:[%s5] sm:$0xff]
        %v349 = vld [vmem:[%s5 + $0x8] sm:$0xff]
        %v350 = vld [vmem:[%s5 + $0x10] sm:$0xff]
        %v351 = vld [vmem:[%s5 + $0x18] sm:$0xff]
        %353 = vset.pattern.permute.xlu0 0
        %354 = vperm.xlu0 %353, %v328
        %v355 = vpop.permute.xlu0 %354
        %358 = vset.pattern.permute.xlu0 0
        %359 = vperm.xlu0 %358, %v329
        %v360 = vpop.permute.xlu0 %359
        %363 = vset.pattern.permute.xlu0 0
        %364 = vperm.xlu0 %363, %v330
        %v365 = vpop.permute.xlu0 %364
        %368 = vset.pattern.permute.xlu0 0
        %369 = vperm.xlu0 %368, %v331
        %v370 = vpop.permute.xlu0 %369
        %373 = vset.pattern.permute.xlu0 0
        %374 = vperm.xlu0 %373, %v332
        %v375 = vpop.permute.xlu0 %374
        %378 = vset.pattern.permute.xlu0 0
        %379 = vperm.xlu0 %378, %v333
        %v380 = vpop.permute.xlu0 %379
        %383 = vset.pattern.permute.xlu0 0
        %384 = vperm.xlu0 %383, %v334
        %v385 = vpop.permute.xlu0 %384
        %388 = vset.pattern.permute.xlu0 0
        %389 = vperm.xlu0 %388, %v335
        %v390 = vpop.permute.xlu0 %389
        %vm392 = vcmask 31744
        %v394 = vsel %vm392, %v320, 0
        %v397 = vsel %vm392, %v321, 0
        %v400 = vsel %vm392, %v322, 0
        %v403 = vsel %vm392, %v323, 0
        %v406 = vsel %vm392, %v324, 0
        %v409 = vsel %vm392, %v325, 0
        %v412 = vsel %vm392, %v326, 0
        %v415 = vsel %vm392, %v327, 0
        %vm417 = vcmask 1043456
        %v419 = vsel %vm417, %v287, 0
        %421 = vmatprep.subr.mxu0 0.0
        %422 = vmatpush1.msra.mxu0 %v419
        %423 = vmatprep.subr.mxu0 0.0
        %424 = vmatpush1.msra.mxu0 0.0
        %425 = vmatprep.subr.mxu0 0.0
        %426 = vmatpush1.msra.mxu0 0.0
        %427 = vmatprep.subr.mxu0 0.0
        %428 = vmatpush1.msra.mxu0 0.0
        %429 = vmatprep.subr.mxu0 0.0
        %430 = vmatpush1.msra.mxu0 0.0
        %431 = vmatprep.subr.mxu0 0.0
        %432 = vmatpush1.msra.mxu0 0.0
        %433 = vmatprep.subr.mxu0 0.0
        %434 = vmatpush1.msra.mxu0 0.0
        %435 = vmatprep.subr.mxu0 0.0
        %436 = vmatpush1.msra.mxu0 0.0
        %437 = vmatprep.subr.mxu0 0.0
        %438 = vmatpush1.msra.mxu0 0.0
        %439 = vmatprep.subr.mxu0 0.0
        %440 = vmatpush1.msra.mxu0 0.0
        %441 = vmatprep.subr.mxu0 0.0
        %442 = vmatpush1.msra.mxu0 0.0
        %443 = vmatprep.subr.mxu0 0.0
        %444 = vmatpush1.msra.mxu0 0.0
        %445 = vmatprep.subr.mxu0 0.0
        %446 = vmatpush1.msra.mxu0 0.0
        %447 = vmatprep.subr.mxu0 0.0
        %448 = vmatpush1.msra.mxu0 0.0
        %449 = vmatprep.subr.mxu0 0.0
        %450 = vmatpush1.msra.mxu0 0.0
        %451 = vmatprep.subr.mxu0 0.0
        %452 = vmatpush1.msra.mxu0 0.0
        %453 = vmatprep.subr.mxu0 0.0
        %454 = vmatpush1.msra.mxu0 0.0
        %455 = vmatprep.subr.mxu0 0.0
        %456 = vmatpush1.msra.mxu0 0.0
        %457 = vmatprep.subr.mxu0 0.0
        %458 = vmatpush1.msra.mxu0 0.0
        %459 = vmatprep.subr.mxu0 0.0
        %460 = vmatpush1.msra.mxu0 0.0
        %461 = vmatprep.subr.mxu0 0.0
        %462 = vmatpush1.msra.mxu0 0.0
        %463 = vmatprep.subr.mxu0 0.0
        %464 = vmatpush1.msra.mxu0 0.0
        %465 = vmatprep.subr.mxu0 0.0
        %466 = vmatpush1.msra.mxu0 0.0
        %467 = vmatprep.subr.mxu0 0.0
        %468 = vmatpush1.msra.mxu0 0.0
        %469 = vmatprep.subr.mxu0 0.0
        %470 = vmatpush1.msra.mxu0 0.0
        %471 = vmatprep.subr.mxu0 0.0
        %472 = vmatpush1.msra.mxu0 0.0
        %473 = vmatprep.subr.mxu0 0.0
        %474 = vmatpush1.msra.mxu0 0.0
        %475 = vmatprep.subr.mxu0 0.0
        %476 = vmatpush1.msra.mxu0 0.0
        %477 = vmatprep.subr.mxu0 0.0
        %478 = vmatpush1.msra.mxu0 0.0
        %479 = vmatprep.subr.mxu0 0.0
        %480 = vmatpush1.msra.mxu0 0.0
        %481 = vmatprep.subr.mxu0 0.0
        %482 = vmatpush1.msra.mxu0 0.0
        %483 = vmatprep.subr.mxu0 0.0
        %484 = vmatpush1.msra.mxu0 0.0
        %485 = vmatprep.mubr.f32.mxu0 0.0
        %486 = vmatmul.mubr.f32.gmra.mrb[0].mxu0 %v394
        %v487 = vpop.f32.mrb[0].mxu0
        %v488 = vadd.f32 %v355, %v487
        %v489 = vpop.f32.mrb[0].mxu0
        %490 = vmatprep.mubr.f32.mxu0 0.0
        %491 = vmatmul.mubr.f32.gmra.mrb[0].mxu0 %v397
        %v492 = vpop.f32.mrb[0].mxu0
        %v493 = vadd.f32 %v360, %v492
        %v494 = vpop.f32.mrb[0].mxu0
        %495 = vmatprep.mubr.f32.mxu0 0.0
        %496 = vmatmul.mubr.f32.gmra.mrb[0].mxu0 %v400
        %v497 = vpop.f32.mrb[0].mxu0
        %v498 = vadd.f32 %v365, %v497
        %v499 = vpop.f32.mrb[0].mxu0
        %500 = vmatprep.mubr.f32.mxu0 0.0
        %501 = vmatmul.mubr.f32.gmra.mrb[0].mxu0 %v403
        %v502 = vpop.f32.mrb[0].mxu0
        %v503 = vadd.f32 %v370, %v502
        %v504 = vpop.f32.mrb[0].mxu0
        %505 = vmatprep.mubr.f32.mxu0 0.0
        %506 = vmatmul.mubr.f32.gmra.mrb[0].mxu0 %v406
        %v507 = vpop.f32.mrb[0].mxu0
        %v508 = vadd.f32 %v375, %v507
        %v509 = vpop.f32.mrb[0].mxu0
        %510 = vmatprep.mubr.f32.mxu0 0.0
        %511 = vmatmul.mubr.f32.gmra.mrb[0].mxu0 %v409
        %v512 = vpop.f32.mrb[0].mxu0
        %v513 = vadd.f32 %v380, %v512
        %v514 = vpop.f32.mrb[0].mxu0
        %515 = vmatprep.mubr.f32.mxu0 0.0
        %516 = vmatmul.mubr.f32.gmra.mrb[0].mxu0 %v412
        %v517 = vpop.f32.mrb[0].mxu0
        %v518 = vadd.f32 %v385, %v517
        %v519 = vpop.f32.mrb[0].mxu0
        %520 = vmatprep.mubr.f32.mxu0 0.0
        %521 = vmatmul.mubr.f32.gmra.mrb[0].mxu0 %v415
        %v522 = vpop.f32.mrb[0].mxu0
        %v523 = vadd.f32 %v390, %v522
        %v524 = vpop.f32.mrb[0].mxu0
        %525 = vdwg.mxu0
        %526 = vmatprep.subr.mxu0 0.0
        %527 = vmatpush1.msra.mxu0 %v304
        %528 = vmatprep.subr.mxu0 0.0
        %529 = vmatpush1.msra.mxu0 %v305
        %530 = vmatprep.subr.mxu0 0.0
        %531 = vmatpush1.msra.mxu0 %v306
        %532 = vmatprep.subr.mxu0 0.0
        %533 = vmatpush1.msra.mxu0 %v307
        %534 = vmatprep.subr.mxu0 0.0
        %535 = vmatpush1.msra.mxu0 %v308
        %536 = vmatprep.subr.mxu0 0.0
        %537 = vmatpush1.msra.mxu0 %v309
        %538 = vmatprep.subr.mxu0 0.0
        %539 = vmatpush1.msra.mxu0 %v310
        %540 = vmatprep.subr.mxu0 0.0
        %541 = vmatpush1.msra.mxu0 %v311
        %542 = vmatprep.subr.mxu0 0.0
        %543 = vmatpush1.msra.mxu0 %v312
        %544 = vmatprep.subr.mxu0 0.0
        %545 = vmatpush1.msra.mxu0 %v313
        %546 = vmatprep.subr.mxu0 0.0
        %547 = vmatpush1.msra.mxu0 %v314
        %548 = vmatprep.subr.mxu0 0.0
        %549 = vmatpush1.msra.mxu0 %v315
        %550 = vmatprep.subr.mxu0 0.0
        %551 = vmatpush1.msra.mxu0 %v316
        %552 = vmatprep.subr.mxu0 0.0
        %553 = vmatpush1.msra.mxu0 %v317
        %554 = vmatprep.subr.mxu0 0.0
        %555 = vmatpush1.msra.mxu0 %v318
        %556 = vmatprep.subr.mxu0 0.0
        %557 = vmatpush1.msra.mxu0 %v319
        %558 = vmatprep.subr.mxu0 0.0
        %559 = vmatpush1.msra.mxu0 0.0
        %560 = vmatprep.subr.mxu0 0.0
        %561 = vmatpush1.msra.mxu0 0.0
        %562 = vmatprep.subr.mxu0 0.0
        %563 = vmatpush1.msra.mxu0 0.0
        %564 = vmatprep.subr.mxu0 0.0
        %565 = vmatpush1.msra.mxu0 0.0
        %566 = vmatprep.subr.mxu0 0.0
        %567 = vmatpush1.msra.mxu0 0.0
        %568 = vmatprep.subr.mxu0 0.0
        %569 = vmatpush1.msra.mxu0 0.0
        %570 = vmatprep.subr.mxu0 0.0
        %571 = vmatpush1.msra.mxu0 0.0
        %572 = vmatprep.subr.mxu0 0.0
        %573 = vmatpush1.msra.mxu0 0.0
        %574 = vmatprep.subr.mxu0 0.0
        %575 = vmatpush1.msra.mxu0 0.0
        %576 = vmatprep.subr.mxu0 0.0
        %577 = vmatpush1.msra.mxu0 0.0
        %578 = vmatprep.subr.mxu0 0.0
        %579 = vmatpush1.msra.mxu0 0.0
        %580 = vmatprep.subr.mxu0 0.0
        %581 = vmatpush1.msra.mxu0 0.0
        %582 = vmatprep.subr.mxu0 0.0
        %583 = vmatpush1.msra.mxu0 0.0
        %584 = vmatprep.subr.mxu0 0.0
        %585 = vmatpush1.msra.mxu0 0.0
        %586 = vmatprep.subr.mxu0 0.0
        %587 = vmatpush1.msra.mxu0 0.0
        %588 = vmatprep.subr.mxu0 0.0
        %589 = vmatpush1.msra.mxu0 0.0
        %590 = vmatprep.mubr.f32.mxu0 0.0
        %591 = vmatmul.mubr.f32.gmra.mrb[0].mxu0 %v508
        %v592 = vpop.f32.mrb[0].mxu0
        %v593 = vadd.f32 0.0, %v592
        %v594 = vpop.f32.mrb[0].mxu0
        %595 = vmatprep.mubr.f32.mxu0 0.0
        %596 = vmatmul.mubr.f32.gmra.mrb[0].mxu0 %v513
        %v597 = vpop.f32.mrb[0].mxu0
        %v598 = vadd.f32 0.0, %v597
        %v599 = vpop.f32.mrb[0].mxu0
        %600 = vmatprep.mubr.f32.mxu0 0.0
        %601 = vmatmul.mubr.f32.gmra.mrb[0].mxu0 %v518
        %v602 = vpop.f32.mrb[0].mxu0
        %v603 = vadd.f32 0.0, %v602
        %v604 = vpop.f32.mrb[0].mxu0
        %605 = vmatprep.mubr.f32.mxu0 0.0
        %606 = vmatmul.mubr.f32.gmra.mrb[0].mxu0 %v523
        %v607 = vpop.f32.mrb[0].mxu0
        %v608 = vadd.f32 0.0, %v607
        %v609 = vpop.f32.mrb[0].mxu0
        %610 = vdwg.mxu0
        %611 = vmatprep.subr.mxu0 0.0
        %612 = vmatpush1.msra.mxu0 %v288
        %613 = vmatprep.subr.mxu0 0.0
        %614 = vmatpush1.msra.mxu0 %v289
        %615 = vmatprep.subr.mxu0 0.0
        %616 = vmatpush1.msra.mxu0 %v290
        %617 = vmatprep.subr.mxu0 0.0
        %618 = vmatpush1.msra.mxu0 %v291
        %619 = vmatprep.subr.mxu0 0.0
        %620 = vmatpush1.msra.mxu0 %v292
        %621 = vmatprep.subr.mxu0 0.0
        %622 = vmatpush1.msra.mxu0 %v293
        %623 = vmatprep.subr.mxu0 0.0
        %624 = vmatpush1.msra.mxu0 %v294
        %625 = vmatprep.subr.mxu0 0.0
        %626 = vmatpush1.msra.mxu0 %v295
        %627 = vmatprep.subr.mxu0 0.0
        %628 = vmatpush1.msra.mxu0 %v296
        %629 = vmatprep.subr.mxu0 0.0
        %630 = vmatpush1.msra.mxu0 %v297
        %631 = vmatprep.subr.mxu0 0.0
        %632 = vmatpush1.msra.mxu0 %v298
        %633 = vmatprep.subr.mxu0 0.0
        %634 = vmatpush1.msra.mxu0 %v299
        %635 = vmatprep.subr.mxu0 0.0
        %636 = vmatpush1.msra.mxu0 %v300
        %637 = vmatprep.subr.mxu0 0.0
        %638 = vmatpush1.msra.mxu0 %v301
        %639 = vmatprep.subr.mxu0 0.0
        %640 = vmatpush1.msra.mxu0 %v302
        %641 = vmatprep.subr.mxu0 0.0
        %642 = vmatpush1.msra.mxu0 %v303
        %643 = vmatprep.subr.mxu0 0.0
        %644 = vmatpush1.msra.mxu0 0.0
        %645 = vmatprep.subr.mxu0 0.0
        %646 = vmatpush1.msra.mxu0 0.0
        %647 = vmatprep.subr.mxu0 0.0
        %648 = vmatpush1.msra.mxu0 0.0
        %649 = vmatprep.subr.mxu0 0.0
        %650 = vmatpush1.msra.mxu0 0.0
        %651 = vmatprep.subr.mxu0 0.0
        %652 = vmatpush1.msra.mxu0 0.0
        %653 = vmatprep.subr.mxu0 0.0
        %654 = vmatpush1.msra.mxu0 0.0
        %655 = vmatprep.subr.mxu0 0.0
        %656 = vmatpush1.msra.mxu0 0.0
        %657 = vmatprep.subr.mxu0 0.0
        %658 = vmatpush1.msra.mxu0 0.0
        %659 = vmatprep.subr.mxu0 0.0
        %660 = vmatpush1.msra.mxu0 0.0
        %661 = vmatprep.subr.mxu0 0.0
        %662 = vmatpush1.msra.mxu0 0.0
        %663 = vmatprep.subr.mxu0 0.0
        %664 = vmatpush1.msra.mxu0 0.0
        %665 = vmatprep.subr.mxu0 0.0
        %666 = vmatpush1.msra.mxu0 0.0
        %667 = vmatprep.subr.mxu0 0.0
        %668 = vmatpush1.msra.mxu0 0.0
        %669 = vmatprep.subr.mxu0 0.0
        %670 = vmatpush1.msra.mxu0 0.0
        %671 = vmatprep.subr.mxu0 0.0
        %672 = vmatpush1.msra.mxu0 0.0
        %673 = vmatprep.subr.mxu0 0.0
        %674 = vmatpush1.msra.mxu0 0.0
        %675 = vmatprep.mubr.f32.mxu0 0.0
        %676 = vmatmul.mubr.f32.gmra.mrb[0].mxu0 %v488
        %v677 = vpop.f32.mrb[0].mxu0
        %v678 = vadd.f32 %v593, %v677
        %v679 = vpop.f32.mrb[0].mxu0
        %680 = vmatprep.mubr.f32.mxu0 0.0
        %681 = vmatmul.mubr.f32.gmra.mrb[0].mxu0 %v493
        %v682 = vpop.f32.mrb[0].mxu0
        %v683 = vadd.f32 %v598, %v682
        %v684 = vpop.f32.mrb[0].mxu0
        %685 = vmatprep.mubr.f32.mxu0 0.0
        %686 = vmatmul.mubr.f32.gmra.mrb[0].mxu0 %v498
        %v687 = vpop.f32.mrb[0].mxu0
        %v688 = vadd.f32 %v603, %v687
        %v689 = vpop.f32.mrb[0].mxu0
        %690 = vmatprep.mubr.f32.mxu0 0.0
        %691 = vmatmul.mubr.f32.gmra.mrb[0].mxu0 %v503
        %v692 = vpop.f32.mrb[0].mxu0
        %v693 = vadd.f32 %v608, %v692
        %v694 = vpop.f32.mrb[0].mxu0
        %695 = vdwg.mxu0
        %vm696 = vcmp.ge.f32.partialorder %v678, 0.0
        %vm697 = vcmp.ge.f32.partialorder %v683, 0.0
        %vm698 = vcmp.ge.f32.partialorder %v688, 0.0
        %vm699 = vcmp.ge.f32.partialorder %v693, 0.0
        %v700 = vmul.f32 %v678, 0.1
        %v701 = vmul.f32 %v683, 0.1
        %v702 = vmul.f32 %v688, 0.1
        %v703 = vmul.f32 %v693, 0.1
        %v704 = vsel %vm696, %v678, %v700
        %v705 = vsel %vm697, %v683, %v701
        %v706 = vsel %vm698, %v688, %v702
        %v707 = vsel %vm699, %v693, %v703
        %709 = vset.pattern.permute.xlu0 0
        %710 = vperm.xlu0 %709, %v348
        %v711 = vpop.permute.xlu0 %710
        %714 = vset.pattern.permute.xlu0 0
        %715 = vperm.xlu0 %714, %v349
        %v716 = vpop.permute.xlu0 %715
        %719 = vset.pattern.permute.xlu0 0
        %720 = vperm.xlu0 %719, %v350
        %v721 = vpop.permute.xlu0 %720
        %724 = vset.pattern.permute.xlu0 0
        %725 = vperm.xlu0 %724, %v351
        %v726 = vpop.permute.xlu0 %725
        %vm728 = vcmask 261120
        %v730 = vsel %vm728, %v336, 0
        %v733 = vsel %vm728, %v337, 0
        %v736 = vsel %vm728, %v338, 0
        %v739 = vsel %vm728, %v339, 0
        %741 = vmatprep.subr.mxu0 0.0
        %742 = vmatpush1.msra.mxu0 %v704
        %743 = vmatprep.subr.mxu0 0.0
        %744 = vmatpush1.msra.mxu0 %v705
        %745 = vmatprep.subr.mxu0 0.0
        %746 = vmatpush1.msra.mxu0 %v706
        %747 = vmatprep.subr.mxu0 0.0
        %748 = vmatpush1.msra.mxu0 %v707
        %749 = vmatprep.subr.mxu0 0.0
        %750 = vmatpush1.msra.mxu0 0.0
        %751 = vmatprep.subr.mxu0 0.0
        %752 = vmatpush1.msra.mxu0 0.0
        %753 = vmatprep.subr.mxu0 0.0
        %754 = vmatpush1.msra.mxu0 0.0
        %755 = vmatprep.subr.mxu0 0.0
        %756 = vmatpush1.msra.mxu0 0.0
        %757 = vmatprep.subr.mxu0 0.0
        %758 = vmatpush1.msra.mxu0 0.0
        %759 = vmatprep.subr.mxu0 0.0
        %760 = vmatpush1.msra.mxu0 0.0
        %761 = vmatprep.subr.mxu0 0.0
        %762 = vmatpush1.msra.mxu0 0.0
        %763 = vmatprep.subr.mxu0 0.0
        %764 = vmatpush1.msra.mxu0 0.0
        %765 = vmatprep.subr.mxu0 0.0
        %766 = vmatpush1.msra.mxu0 0.0
        %767 = vmatprep.subr.mxu0 0.0
        %768 = vmatpush1.msra.mxu0 0.0
        %769 = vmatprep.subr.mxu0 0.0
        %770 = vmatpush1.msra.mxu0 0.0
        %771 = vmatprep.subr.mxu0 0.0
        %772 = vmatpush1.msra.mxu0 0.0
        %773 = vmatprep.subr.mxu0 0.0
        %774 = vmatpush1.msra.mxu0 0.0
        %775 = vmatprep.subr.mxu0 0.0
        %776 = vmatpush1.msra.mxu0 0.0
        %777 = vmatprep.subr.mxu0 0.0
        %778 = vmatpush1.msra.mxu0 0.0
        %779 = vmatprep.subr.mxu0 0.0
        %780 = vmatpush1.msra.mxu0 0.0
        %781 = vmatprep.subr.mxu0 0.0
        %782 = vmatpush1.msra.mxu0 0.0
        %783 = vmatprep.subr.mxu0 0.0
        %784 = vmatpush1.msra.mxu0 0.0
        %785 = vmatprep.subr.mxu0 0.0
        %786 = vmatpush1.msra.mxu0 0.0
        %787 = vmatprep.subr.mxu0 0.0
        %788 = vmatpush1.msra.mxu0 0.0
        %789 = vmatprep.subr.mxu0 0.0
        %790 = vmatpush1.msra.mxu0 0.0
        %791 = vmatprep.subr.mxu0 0.0
        %792 = vmatpush1.msra.mxu0 0.0
        %793 = vmatprep.subr.mxu0 0.0
        %794 = vmatpush1.msra.mxu0 0.0
        %795 = vmatprep.subr.mxu0 0.0
        %796 = vmatpush1.msra.mxu0 0.0
        %797 = vmatprep.subr.mxu0 0.0
        %798 = vmatpush1.msra.mxu0 0.0
        %799 = vmatprep.subr.mxu0 0.0
        %800 = vmatpush1.msra.mxu0 0.0
        %801 = vmatprep.subr.mxu0 0.0
        %802 = vmatpush1.msra.mxu0 0.0
        %803 = vmatprep.subr.mxu0 0.0
        %804 = vmatpush1.msra.mxu0 0.0
        %805 = vmatprep.mubr.f32.mxu0 0.0
        %806 = vmatmul.mubr.f32.gmra.mrb[0].mxu0 %v730
        %v807 = vpop.f32.mrb[0].mxu0
        %v808 = vadd.f32 %v711, %v807
        %v809 = vpop.f32.mrb[0].mxu0
        %810 = vmatprep.mubr.f32.mxu0 0.0
        %811 = vmatmul.mubr.f32.gmra.mrb[0].mxu0 %v733
        %v812 = vpop.f32.mrb[0].mxu0
        %v813 = vadd.f32 %v716, %v812
        %v814 = vpop.f32.mrb[0].mxu0
        %815 = vmatprep.mubr.f32.mxu0 0.0
        %816 = vmatmul.mubr.f32.gmra.mrb[0].mxu0 %v736
        %v817 = vpop.f32.mrb[0].mxu0
        %v818 = vadd.f32 %v721, %v817
        %v819 = vpop.f32.mrb[0].mxu0
        %820 = vmatprep.mubr.f32.mxu0 0.0
        %821 = vmatmul.mubr.f32.gmra.mrb[0].mxu0 %v739
        %v822 = vpop.f32.mrb[0].mxu0
        %v823 = vadd.f32 %v726, %v822
        %v824 = vpop.f32.mrb[0].mxu0
        %825 = vdwg.mxu0
        %830 = vrot.lane.b32.xlu0 %v704, 112
        %v831 = vpop.permute.xlu0 %830
        %832 = vrot.lane.b32.xlu0 %v705, 112
        %v833 = vpop.permute.xlu0 %832
        %834 = vrot.lane.b32.xlu0 %v706, 112
        %v835 = vpop.permute.xlu0 %834
        %836 = vrot.lane.b32.xlu0 %v707, 112
        %v837 = vpop.permute.xlu0 %836
        %v843 = vsel %vm728, %v340, 0
        %v846 = vsel %vm728, %v341, 0
        %v849 = vsel %vm728, %v342, 0
        %v852 = vsel %vm728, %v343, 0
        %854 = vmatprep.subr.mxu0 0.0
        %855 = vmatpush1.msra.mxu0 %v831
        %856 = vmatprep.subr.mxu0 0.0
        %857 = vmatpush1.msra.mxu0 %v833
        %858 = vmatprep.subr.mxu0 0.0
        %859 = vmatpush1.msra.mxu0 %v835
        %860 = vmatprep.subr.mxu0 0.0
        %861 = vmatpush1.msra.mxu0 %v837
        %862 = vmatprep.subr.mxu0 0.0
        %863 = vmatpush1.msra.mxu0 0.0
        %864 = vmatprep.subr.mxu0 0.0
        %865 = vmatpush1.msra.mxu0 0.0
        %866 = vmatprep.subr.mxu0 0.0
        %867 = vmatpush1.msra.mxu0 0.0
        %868 = vmatprep.subr.mxu0 0.0
        %869 = vmatpush1.msra.mxu0 0.0
        %870 = vmatprep.subr.mxu0 0.0
        %871 = vmatpush1.msra.mxu0 0.0
        %872 = vmatprep.subr.mxu0 0.0
        %873 = vmatpush1.msra.mxu0 0.0
        %874 = vmatprep.subr.mxu0 0.0
        %875 = vmatpush1.msra.mxu0 0.0
        %876 = vmatprep.subr.mxu0 0.0
        %877 = vmatpush1.msra.mxu0 0.0
        %878 = vmatprep.subr.mxu0 0.0
        %879 = vmatpush1.msra.mxu0 0.0
        %880 = vmatprep.subr.mxu0 0.0
        %881 = vmatpush1.msra.mxu0 0.0
        %882 = vmatprep.subr.mxu0 0.0
        %883 = vmatpush1.msra.mxu0 0.0
        %884 = vmatprep.subr.mxu0 0.0
        %885 = vmatpush1.msra.mxu0 0.0
        %886 = vmatprep.subr.mxu0 0.0
        %887 = vmatpush1.msra.mxu0 0.0
        %888 = vmatprep.subr.mxu0 0.0
        %889 = vmatpush1.msra.mxu0 0.0
        %890 = vmatprep.subr.mxu0 0.0
        %891 = vmatpush1.msra.mxu0 0.0
        %892 = vmatprep.subr.mxu0 0.0
        %893 = vmatpush1.msra.mxu0 0.0
        %894 = vmatprep.subr.mxu0 0.0
        %895 = vmatpush1.msra.mxu0 0.0
        %896 = vmatprep.subr.mxu0 0.0
        %897 = vmatpush1.msra.mxu0 0.0
        %898 = vmatprep.subr.mxu0 0.0
        %899 = vmatpush1.msra.mxu0 0.0
        %900 = vmatprep.subr.mxu0 0.0
        %901 = vmatpush1.msra.mxu0 0.0
        %902 = vmatprep.subr.mxu0 0.0
        %903 = vmatpush1.msra.mxu0 0.0
        %904 = vmatprep.subr.mxu0 0.0
        %905 = vmatpush1.msra.mxu0 0.0
        %906 = vmatprep.subr.mxu0 0.0
        %907 = vmatpush1.msra.mxu0 0.0
        %908 = vmatprep.subr.mxu0 0.0
        %909 = vmatpush1.msra.mxu0 0.0
        %910 = vmatprep.subr.mxu0 0.0
        %911 = vmatpush1.msra.mxu0 0.0
        %912 = vmatprep.subr.mxu0 0.0
        %913 = vmatpush1.msra.mxu0 0.0
        %914 = vmatprep.subr.mxu0 0.0
        %915 = vmatpush1.msra.mxu0 0.0
        %916 = vmatprep.subr.mxu0 0.0
        %917 = vmatpush1.msra.mxu0 0.0
        %918 = vmatprep.mubr.f32.mxu0 0.0
        %919 = vmatmul.mubr.f32.gmra.mrb[0].mxu0 %v843
        %v920 = vpop.f32.mrb[0].mxu0
        %v921 = vadd.f32 0.0, %v920
        %v922 = vpop.f32.mrb[0].mxu0
        %923 = vmatprep.mubr.f32.mxu0 0.0
        %924 = vmatmul.mubr.f32.gmra.mrb[0].mxu0 %v846
        %v925 = vpop.f32.mrb[0].mxu0
        %v926 = vadd.f32 0.0, %v925
        %v927 = vpop.f32.mrb[0].mxu0
        %928 = vmatprep.mubr.f32.mxu0 0.0
        %929 = vmatmul.mubr.f32.gmra.mrb[0].mxu0 %v849
        %v930 = vpop.f32.mrb[0].mxu0
        %v931 = vadd.f32 0.0, %v930
        %v932 = vpop.f32.mrb[0].mxu0
        %933 = vmatprep.mubr.f32.mxu0 0.0
        %934 = vmatmul.mubr.f32.gmra.mrb[0].mxu0 %v852
        %v935 = vpop.f32.mrb[0].mxu0
        %v936 = vadd.f32 0.0, %v935
        %v937 = vpop.f32.mrb[0].mxu0
        %938 = vdwg.mxu0
        %v939 = vadd.f32 %v808, %v921
        %v940 = vadd.f32 %v813, %v926
        %v941 = vadd.f32 %v818, %v931
        %v942 = vadd.f32 %v823, %v936
        %943 = vrot.lane.b32.xlu0 %v704, 96
        %v944 = vpop.permute.xlu0 %943
        %945 = vrot.lane.b32.xlu0 %v705, 96
        %v946 = vpop.permute.xlu0 %945
        %947 = vrot.lane.b32.xlu0 %v706, 96
        %v948 = vpop.permute.xlu0 %947
        %949 = vrot.lane.b32.xlu0 %v707, 96
        %v950 = vpop.permute.xlu0 %949
        %v956 = vsel %vm728, %v344, 0
        %v959 = vsel %vm728, %v345, 0
        %v962 = vsel %vm728, %v346, 0
        %v965 = vsel %vm728, %v347, 0
        %967 = vmatprep.subr.mxu0 0.0
        %968 = vmatpush1.msra.mxu0 %v944
        %969 = vmatprep.subr.mxu0 0.0
        %970 = vmatpush1.msra.mxu0 %v946
        %971 = vmatprep.subr.mxu0 0.0
        %972 = vmatpush1.msra.mxu0 %v948
        %973 = vmatprep.subr.mxu0 0.0
        %974 = vmatpush1.msra.mxu0 %v950
        %975 = vmatprep.subr.mxu0 0.0
        %976 = vmatpush1.msra.mxu0 0.0
        %977 = vmatprep.subr.mxu0 0.0
        %978 = vmatpush1.msra.mxu0 0.0
        %979 = vmatprep.subr.mxu0 0.0
        %980 = vmatpush1.msra.mxu0 0.0
        %981 = vmatprep.subr.mxu0 0.0
        %982 = vmatpush1.msra.mxu0 0.0
        %983 = vmatprep.subr.mxu0 0.0
        %984 = vmatpush1.msra.mxu0 0.0
        %985 = vmatprep.subr.mxu0 0.0
        %986 = vmatpush1.msra.mxu0 0.0
        %987 = vmatprep.subr.mxu0 0.0
        %988 = vmatpush1.msra.mxu0 0.0
        %989 = vmatprep.subr.mxu0 0.0
        %990 = vmatpush1.msra.mxu0 0.0
        %991 = vmatprep.subr.mxu0 0.0
        %992 = vmatpush1.msra.mxu0 0.0
        %993 = vmatprep.subr.mxu0 0.0
        %994 = vmatpush1.msra.mxu0 0.0
        %995 = vmatprep.subr.mxu0 0.0
        %996 = vmatpush1.msra.mxu0 0.0
        %997 = vmatprep.subr.mxu0 0.0
        %998 = vmatpush1.msra.mxu0 0.0
        %999 = vmatprep.subr.mxu0 0.0
        %1000 = vmatpush1.msra.mxu0 0.0
        %1001 = vmatprep.subr.mxu0 0.0
        %1002 = vmatpush1.msra.mxu0 0.0
        %1003 = vmatprep.subr.mxu0 0.0
        %1004 = vmatpush1.msra.mxu0 0.0
        %1005 = vmatprep.subr.mxu0 0.0
        %1006 = vmatpush1.msra.mxu0 0.0
        %1007 = vmatprep.subr.mxu0 0.0
        %1008 = vmatpush1.msra.mxu0 0.0
        %1009 = vmatprep.subr.mxu0 0.0
        %1010 = vmatpush1.msra.mxu0 0.0
        %1011 = vmatprep.subr.mxu0 0.0
        %1012 = vmatpush1.msra.mxu0 0.0
        %1013 = vmatprep.subr.mxu0 0.0
        %1014 = vmatpush1.msra.mxu0 0.0
        %1015 = vmatprep.subr.mxu0 0.0
        %1016 = vmatpush1.msra.mxu0 0.0
        %1017 = vmatprep.subr.mxu0 0.0
        %1018 = vmatpush1.msra.mxu0 0.0
        %1019 = vmatprep.subr.mxu0 0.0
        %1020 = vmatpush1.msra.mxu0 0.0
        %1021 = vmatprep.subr.mxu0 0.0
        %1022 = vmatpush1.msra.mxu0 0.0
        %1023 = vmatprep.subr.mxu0 0.0
        %1024 = vmatpush1.msra.mxu0 0.0
        %1025 = vmatprep.subr.mxu0 0.0
        %1026 = vmatpush1.msra.mxu0 0.0
        %1027 = vmatprep.subr.mxu0 0.0
        %1028 = vmatpush1.msra.mxu0 0.0
        %1029 = vmatprep.subr.mxu0 0.0
        %1030 = vmatpush1.msra.mxu0 0.0
        %1031 = vmatprep.mubr.f32.mxu0 0.0
        %1032 = vmatmul.mubr.f32.gmra.mrb[0].mxu0 %v956
        %v1033 = vpop.f32.mrb[0].mxu0
        %v1034 = vadd.f32 0.0, %v1033
        %v1035 = vpop.f32.mrb[0].mxu0
        %1036 = vmatprep.mubr.f32.mxu0 0.0
        %1037 = vmatmul.mubr.f32.gmra.mrb[0].mxu0 %v959
        %v1038 = vpop.f32.mrb[0].mxu0
        %v1039 = vadd.f32 0.0, %v1038
        %v1040 = vpop.f32.mrb[0].mxu0
        %1041 = vmatprep.mubr.f32.mxu0 0.0
        %1042 = vmatmul.mubr.f32.gmra.mrb[0].mxu0 %v962
        %v1043 = vpop.f32.mrb[0].mxu0
        %v1044 = vadd.f32 0.0, %v1043
        %v1045 = vpop.f32.mrb[0].mxu0
        %1046 = vmatprep.mubr.f32.mxu0 0.0
        %1047 = vmatmul.mubr.f32.gmra.mrb[0].mxu0 %v965
        %v1048 = vpop.f32.mrb[0].mxu0
        %v1049 = vadd.f32 0.0, %v1048
        %v1050 = vpop.f32.mrb[0].mxu0
        %1051 = vdwg.mxu0
        %v1052 = vadd.f32 %v939, %v1034
        %v1053 = vadd.f32 %v940, %v1039
        %v1054 = vadd.f32 %v941, %v1044
        %v1055 = vadd.f32 %v942, %v1049
        %vm1056 = vcmp.ge.f32.partialorder %v1052, 0.0
        %vm1057 = vcmp.ge.f32.partialorder %v1053, 0.0
        %vm1058 = vcmp.ge.f32.partialorder %v1054, 0.0
        %vm1059 = vcmp.ge.f32.partialorder %v1055, 0.0
        %v1060 = vmul.f32 %v1052, 0.1
        %v1061 = vmul.f32 %v1053, 0.1
        %v1062 = vmul.f32 %v1054, 0.1
        %v1063 = vmul.f32 %v1055, 0.1
        %v1064 = vsel %vm1056, %v1052, %v1060
        %v1065 = vsel %vm1057, %v1053, %v1061
        %v1066 = vsel %vm1058, %v1054, %v1062
        %v1067 = vsel %vm1059, %v1055, %v1063
        %vm1068 = vcmask 785408
        %1069 = vst.msk [vmem:[%s282] sm:$0xff] %vm1068, %v1064
        %1070 = vst.msk [vmem:[%s282 + $0x8] sm:$0xff] %vm1068, %v1065
        %1071 = vst.msk [vmem:[%s282 + $0x10] sm:$0xff] %vm1068, %v1066
        %1072 = vst.msk [vmem:[%s282 + $0x18] sm:$0xff] %vm1068, %v1067
        %s1073 = sand.u32 %s167, 1
        %s1074 = scalar_lea.sflag [#allocation4], %s1073
        %s1075 = sand.u32 %s167, 1
        %s1076 = smul.addr %s1075, 32
        %s1077 = scalar_lea.vmem [#allocation5], %s1076
        // Predicated region
        $region49: #{tpu_custom_call.1} parent=43 // pred_check
          %p1078 = pneg %p177
        $region50: #{tpu_custom_call.1} parent=43 // pred_check_branch
          %1080 = sbr.rel (%p1078) target = $region52
        $region51: #{tpu_custom_call.1} parent=43 // pred_region
          %s1082 = ssub.s32 512, 512
          %1083 = vsyncadd %s1074, %s1082
          %s1084 = smul.addr %s23, 4
          %s1085 = smul.addr %s1084, 128
          %s1086 = scalar_lea.hbm %s6, %s1085
          %s1087 = sshll.u32 %s1077, 4
          %s1088 = int_to_ptr.vmem [resolvable:$true] %s1087
          %1093 = dma.vmem_to_hbm [thread:$0]  %s1088, 512, %s1086, %s1074, 128, 128, 8
        $region52: #{tpu_custom_call.1} parent=43 // pred_fallthru
          _
      $region44: #{tpu_custom_call.1} parent=5 // pred_fallthru
        _
      %p1094 = scmp.le.s32.totalorder 2, %s18
      // Predicated region
      $region53: #{tpu_custom_call.1} parent=5 // pred_check
        %p1095 = pneg %p1094
      $region54: #{tpu_custom_call.1} parent=5 // pred_check_branch
        %1097 = sbr.rel (%p1095) target = $region56
      $region55: #{tpu_custom_call.1} parent=5 // pred_region
        %s1098 = ssub.s32 %s18, 2
        // Predicated region
        $region57: #{tpu_custom_call.1} parent=55 // pred_check
          %p1099 = pneg %p183
        $region58: #{tpu_custom_call.1} parent=55 // pred_check_branch
          %1101 = sbr.rel (%p1099) target = $region60
        $region59: #{tpu_custom_call.1} parent=55 // pred_region
          %s1102 = sand.u32 %s168, 1
          %s1103 = scalar_lea.sflag [#allocation4], %s1102
          %s1104 = sand.u32 %s168, 1
          %s1105 = smul.addr %s1104, 32
          %s1106 = scalar_lea.vmem [#allocation5], %s1105
          %1107 = dma.done %s1103, 512
        $region60: #{tpu_custom_call.1} parent=55 // pred_fallthru
          _
      $region56: #{tpu_custom_call.1} parent=5 // pred_fallthru
        _
    $region6: #{tpu_custom_call.1} parent=1 // loop_footer
      %s22 = sadd.s32 1, %s18
    $region7: #{tpu_custom_call.1} parent=1 // loop_footer_branch
      %17 = sbr.rel target = $region3
    $region8: #{tpu_custom_call.1} parent=1 // loop_exit
      _
    %1108 = vsyncpa [#allocation3], 1
    %s1109 = scalar_lea.sflag [#allocation3], 1
    %1110 = vsyncpa %s1109, 1
    %1111 = vsyncpa [#allocation4], 1
    %s1112 = scalar_lea.sflag [#allocation4], 1
    %1113 = vsyncpa %s1112, 1

</llo_original>
